<compile_context>
chip_gen: v7x
topology: tpu7x:2x2x1
jax: 0.10.0
libtpu: 0.0.40
codegen_flags: <defaults>
</compile_context>

<pallas_src>
import math
from functools import partial

import jax
import jax.numpy as jnp
from jax.experimental import pallas as pl
from jax.experimental.pallas import tpu as pltpu


def _lrelu(v, slope=0.2):
    # max(v, slope*v) == LeakyReLU(slope) for 0 < slope < 1 (mul+max, 2 VPU ops).
    return jnp.maximum(v, slope * v)


def _round_up(n, m):
    return ((n + m - 1) // m) * m


def _fold_bn(w, b, gamma, beta, mean, var, eps=1e-5):
    """Fold an eval-mode BatchNorm1d into the preceding Linear (y = x@W + b)."""
    s = gamma / jnp.sqrt(var + eps)              # [1, F]
    t = beta - mean * s                          # [1, F]
    return w * s, jnp.reshape(b * s + t, (1, -1))


# ----------------------------- kernel --------------------------------------

def _make_kernel(block_num):
    def kernel(x_ref, *refs):
        o_ref = refs[-1]
        w_in_ref = refs[0]
        w_refs = refs[1:1 + 2 * block_num]
        w_out_ref = refs[1 + 2 * block_num]
        bias_ref = refs[2 + 2 * block_num]
        b_out_ref = refs[3 + 2 * block_num]

        wdt = w_in_ref.dtype                     # matmul operand dtype (bf16)
        biases = bias_ref[...]                   # [1 + 2B, L] float32

        # fc_1 + bn_1 (folded) + LeakyReLU. Dropout is identity in eval mode.
        h = jnp.dot(x_ref[...].astype(wdt), w_in_ref[...],
                    preferred_element_type=jnp.float32) + biases[0]
        h = _lrelu(h)

        # residual Linear blocks (BN folded into W1/W2); residual stays f32.
        for blk in range(block_num):
            w1 = w_refs[2 * blk]
            w2 = w_refs[2 * blk + 1]
            y = _lrelu(jnp.dot(h.astype(wdt), w1[...],
                               preferred_element_type=jnp.float32)
                       + biases[1 + 2 * blk])
            y = _lrelu(jnp.dot(y.astype(wdt), w2[...],
                               preferred_element_type=jnp.float32)
                       + biases[2 + 2 * blk])
            h = h + y

        # fc_2 (plain Linear). Output columns are zero-padded to a 128-lane
        # multiple so the store path is lane-dense (unmasked vst).
        o_ref[...] = (jnp.dot(h.astype(wdt), w_out_ref[...],
                              preferred_element_type=jnp.float32)
                      + b_out_ref[...]).astype(o_ref.dtype)

    return kernel


# ----------------------------- wrapper --------------------------------------

_HAS_BUFFERED = hasattr(pl, "Buffered")


def _const_spec(shape):
    """Grid-invariant operand: fetched once and, where supported, single-
    buffered (pure VMEM savings — matters most on v7x's 64 MiB/TC VMEM)."""
    idx_map = lambda i: (0,) * len(shape)
    if _HAS_BUFFERED:
        return pl.BlockSpec(shape, idx_map, pipeline_mode=pl.Buffered(1))
    return pl.BlockSpec(shape, idx_map)


@partial(jax.jit, static_argnames=("cout", "tm"))
def fc_block_forward(x, w_in, block_ws, w_out, bias_pack, b_out, *,
                     cout, tm=1024):
    """Fused eval-mode FCBlock forward.

    x         : [N, channel_in] float32
    w_in      : [channel_in, L]          (BN folded; matmul dtype, e.g. bf16)
    block_ws  : tuple of 2*block_num [L, L] weights (w1_0, w2_0, w1_1, ...)
    w_out     : [L, cout_pad]            (columns zero-padded to 128 lanes)
    bias_pack : [1 + 2*block_num, L]     float32 fused biases
    b_out     : [1, cout_pad]            float32
    cout      : true output width (static); result is [N, cout]
    """
    N, cin = x.shape
    L = w_in.shape[1]
    cout_pad = w_out.shape[1]
    block_num = len(block_ws) // 2

    # Pad the batch only to the f32 sublane multiple (8). The grid uses cdiv,
    # so a ragged last tile is handled by Pallas edge masking; rows are
    # independent, so garbage in padded rows cannot contaminate valid outputs.
    n8 = _round_up(max(N, 1), 8)
    if n8 != N:
        x = jnp.pad(x, ((0, n8 - N), (0, 0)))

    tm_eff = max(8, min(_round_up(tm, 8), n8))
    grid = (pl.cdiv(n8, tm_eff),)

    flat = [w_in, *block_ws, w_out, bias_pack, b_out]

    in_specs = [pl.BlockSpec((tm_eff, cin), lambda i: (i, 0))]
    in_specs += [_const_spec(tuple(a.shape)) for a in flat]
    out_spec = pl.BlockSpec((tm_eff, cout_pad), lambda i: (i, 0))

    # VMEM budget from the real footprint: weights single-buffered + the
    # double-buffered streamed x/out tiles, with headroom; capped at 100 MiB
    # (v5e/v6e) and naturally far below v7x's 64 MiB/TC for small configs.
    itemsize = x.dtype.itemsize
    param_bytes = sum(int(a.size) * a.dtype.itemsize for a in flat)
    tile_bytes = tm_eff * (cin + cout_pad) * itemsize
    needed = param_bytes + 2 * tile_bytes
    vmem_limit = int(min(100 << 20, max(needed * 3 // 2 + (8 << 20), 16 << 20)))

    flops = 2 * n8 * (cin * L + 2 * block_num * L * L + L * cout_pad)
    bytes_accessed = n8 * (cin + cout_pad) * itemsize + param_bytes

    out = pl.pallas_call(
        _make_kernel(block_num),
        out_shape=jax.ShapeDtypeStruct((n8, cout_pad), x.dtype),
        grid_spec=pltpu.PrefetchScalarGridSpec(
            num_scalar_prefetch=0,
            grid=grid,
            in_specs=in_specs,
            out_specs=out_spec),
        compiler_params=pltpu.CompilerParams(
            dimension_semantics=("parallel",),
            vmem_limit_bytes=vmem_limit),
        cost_estimate=pl.CostEstimate(
            flops=int(flops), transcendentals=0,
            bytes_accessed=int(bytes_accessed)),
    )(x, *flat)

    return out[:N, :cout]


# --------------------------- one-time prep ----------------------------------

def prepare_fc_block_params(w_in, b_in, bn_in, raw_blocks, w_out, b_out, *,
                            weight_dtype=jnp.bfloat16, eps=1e-5):
    """Host-side, one-time prep: fold eval-mode BatchNorms into the preceding
    Linears, cast matmul operands to `weight_dtype` (bf16 by default -> native
    MXU path on every TPU generation), pad the output features to a 128-lane
    multiple, and pack all [1, L] fused biases into a single f32 array."""
    w_in_f, c_in = _fold_bn(w_in, b_in, *bn_in, eps=eps)
    biases = [c_in]
    block_ws = []
    for (w1, b1, bn1, w2, b2, bn2) in raw_blocks:
        w1f, c1 = _fold_bn(w1, b1, *bn1, eps=eps)
        w2f, c2 = _fold_bn(w2, b2, *bn2, eps=eps)
        block_ws += [w1f.astype(weight_dtype), w2f.astype(weight_dtype)]
        biases += [c1, c2]

    cout = int(w_out.shape[1])
    cout_pad = max(128, _round_up(cout, 128))
    w_out_p = jnp.pad(w_out, ((0, 0), (0, cout_pad - cout))).astype(weight_dtype)
    b_out_p = jnp.pad(jnp.reshape(b_out, (1, -1)),
                      ((0, 0), (0, cout_pad - cout))).astype(jnp.float32)
    bias_pack = jnp.concatenate(biases, axis=0).astype(jnp.float32)

    return dict(w_in=w_in_f.astype(weight_dtype),
                block_ws=tuple(block_ws),
                w_out=w_out_p,
                bias_pack=bias_pack,
                b_out=b_out_p,
                cout=cout)


# ----------------------------- references -----------------------------------

def _reference_module(x, w_in, b_in, bn_in, blocks, w_out, b_out, eps=1e-5):
    """Pure-JAX eval-mode FCBlock forward (explicit, un-folded BatchNorm, f32)."""
    def bn(v, p):
        gamma, beta, mean, var = p
        return (v - mean) / jnp.sqrt(var + eps) * gamma + beta

    h = _lrelu(bn(x @ w_in + b_in, bn_in))
    for (w1, b1, bn1, w2, b2, bn2) in blocks:
        y = _lrelu(bn(h @ w1 + b1, bn1))
        y = _lrelu(bn(y @ w2 + b2, bn2))
        h = h + y
    return h @ w_out + b_out


def _reference_folded(x, params):
    """Mirror the kernel math exactly (bf16 operands, f32 accumulation)."""
    wdt = params["w_in"].dtype

    def mm(a, w):
        return jnp.dot(a.astype(wdt), w, preferred_element_type=jnp.float32)

    biases = params["bias_pack"]
    block_ws = params["block_ws"]
    h = _lrelu(mm(x, params["w_in"]) + biases[0])
    for blk in range(len(block_ws) // 2):
        y = _lrelu(mm(h, block_ws[2 * blk]) + biases[1 + 2 * blk])
        y = _lrelu(mm(y, block_ws[2 * blk + 1]) + biases[2 + 2 * blk])
        h = h + y
    out = mm(h, params["w_out"]) + params["b_out"]
    return out[:, :params["cout"]]


# ------------------------------- demo ---------------------------------------

if __name__ == "__main__":
    CH_IN, CH_OUT, LINEAR_SIZE, BLOCK_NUM = 32, 48, 128, 2
    N = 20          # deliberately NOT a multiple of 8 -> exercises padding

    keys = iter(jax.random.split(jax.random.PRNGKey(0), 64))

    def nrm(shape, scale=1.0):
        return scale * jax.random.normal(next(keys), shape, dtype=jnp.float32)

    def make_linear(din, dout):
        return nrm((din, dout), 1.0 / math.sqrt(din)), nrm((1, dout), 0.1)

    def make_bn(d):
        gamma = 1.0 + 0.1 * nrm((1, d))
        beta = 0.1 * nrm((1, d))
        mean = 0.05 * nrm((1, d))
        var = 1.0 + 0.1 * jnp.abs(nrm((1, d)))
        return gamma, beta, mean, var

    x = nrm((N, CH_IN))

    w_in, b_in = make_linear(CH_IN, LINEAR_SIZE)
    bn_in = make_bn(LINEAR_SIZE)
    raw_blocks = []
    for _ in range(BLOCK_NUM):
        w1, b1 = make_linear(LINEAR_SIZE, LINEAR_SIZE)
        bn1 = make_bn(LINEAR_SIZE)
        w2, b2 = make_linear(LINEAR_SIZE, LINEAR_SIZE)
        bn2 = make_bn(LINEAR_SIZE)
        raw_blocks.append((w1, b1, bn1, w2, b2, bn2))
    w_out, b_out = make_linear(LINEAR_SIZE, CH_OUT)

    # One-time host-side prep (BN folding, bf16 cast, lane padding, bias pack).
    params = prepare_fc_block_params(w_in, b_in, bn_in, raw_blocks,
                                     w_out, b_out, weight_dtype=jnp.bfloat16)

    out = fc_block_forward(x, params["w_in"], params["block_ws"],
                           params["w_out"], params["bias_pack"],
                           params["b_out"], cout=params["cout"])
    out = jax.block_until_ready(out)
    assert out.shape == (N, CH_OUT), out.shape

    # Tight check: kernel vs identical folded/bf16-operand math (f32 accum).
    ref_folded = _reference_folded(x, params)
    assert jnp.allclose(out, ref_folded, atol=5e-3, rtol=5e-3), float(
        jnp.max(jnp.abs(out - ref_folded)))

    # Module-semantics check vs the un-folded f32 PyTorch eval forward.
    # Looser tolerance only covers the bf16 weight/activation quantization
    # (the BN folding itself is exact math).
    ref_module = _reference_module(x, w_in, b_in, bn_in, raw_blocks,
                                   w_out, b_out)
    assert jnp.allclose(out, ref_module, atol=5e-2, rtol=5e-2), float(
        jnp.max(jnp.abs(out - ref_module)))

    print("KERNEL_OK")
</pallas_src>

<mosaic_0001>
module attributes {stable_mosaic.version = 11 : i64} {
  func.func @kernel(%arg0: i32, %arg1: memref<24x32xf32, #tpu.memory_space<vmem>>, %arg2: memref<32x128xbf16, #tpu.memory_space<vmem>>, %arg3: memref<128x128xbf16, #tpu.memory_space<vmem>>, %arg4: memref<128x128xbf16, #tpu.memory_space<vmem>>, %arg5: memref<128x128xbf16, #tpu.memory_space<vmem>>, %arg6: memref<128x128xbf16, #tpu.memory_space<vmem>>, %arg7: memref<128x128xbf16, #tpu.memory_space<vmem>>, %arg8: memref<5x128xf32, #tpu.memory_space<vmem>>, %arg9: memref<1x128xf32, #tpu.memory_space<vmem>>, %arg10: memref<24x128xf32, #tpu.memory_space<vmem>>) attributes {dimension_semantics = [#tpu.dimension_semantics<parallel>], iteration_bounds = array<i64: 1>, scalar_prefetch = 0 : i64, scratch_operands = 0 : i64, tpu.core_type = #tpu.core_type<tc>, window_params = [{transform_indices = @transform_0, window_bounds = array<i64: 24, 32>}, {pipeline_mode = #tpu.pipeline_mode<synchronous>, transform_indices = @transform_1, window_bounds = array<i64: 32, 128>}, {pipeline_mode = #tpu.pipeline_mode<synchronous>, transform_indices = @transform_2, window_bounds = array<i64: 128, 128>}, {pipeline_mode = #tpu.pipeline_mode<synchronous>, transform_indices = @transform_3, window_bounds = array<i64: 128, 128>}, {pipeline_mode = #tpu.pipeline_mode<synchronous>, transform_indices = @transform_4, window_bounds = array<i64: 128, 128>}, {pipeline_mode = #tpu.pipeline_mode<synchronous>, transform_indices = @transform_5, window_bounds = array<i64: 128, 128>}, {pipeline_mode = #tpu.pipeline_mode<synchronous>, transform_indices = @transform_6, window_bounds = array<i64: 128, 128>}, {pipeline_mode = #tpu.pipeline_mode<synchronous>, transform_indices = @transform_7, window_bounds = array<i64: 5, 128>}, {pipeline_mode = #tpu.pipeline_mode<synchronous>, transform_indices = @transform_8, window_bounds = array<i64: 1, 128>}, {transform_indices = @transform_9, window_bounds = array<i64: 24, 128>}]} {
    %c0 = arith.constant 0 : index
    %c0_0 = arith.constant 0 : index
    %0 = vector.load %arg8[%c0, %c0_0] : memref<5x128xf32, #tpu.memory_space<vmem>>, vector<5x128xf32>
    %c0_1 = arith.constant 0 : index
    %c0_2 = arith.constant 0 : index
    %1 = vector.load %arg1[%c0_1, %c0_2] : memref<24x32xf32, #tpu.memory_space<vmem>>, vector<24x32xf32>
    %2 = arith.truncf %1 : vector<24x32xf32> to vector<24x32xbf16>
    %c0_3 = arith.constant 0 : index
    %c0_4 = arith.constant 0 : index
    %3 = vector.load %arg2[%c0_3, %c0_4] : memref<32x128xbf16, #tpu.memory_space<vmem>>, vector<32x128xbf16>
    %cst = arith.constant dense<0.000000e+00> : vector<24x128xf32>
    %4 = tpu.matmul %2, %3, %cst {dimension_numbers = #tpu.dot_dimension_numbers<[1], [0], [0], [1], [0, 0, 1, 1], [], []>} : vector<24x32xbf16>, vector<32x128xbf16>, vector<24x128xf32> -> vector<24x128xf32>
    %5 = vector.extract_strided_slice %0 {offsets = [0, 0], sizes = [1, 128], strides = [1, 1]} : vector<5x128xf32> to vector<1x128xf32>
    %6 = vector.shape_cast %5 : vector<1x128xf32> to vector<128xf32>
    %7 = vector.shape_cast %6 : vector<128xf32> to vector<1x128xf32>
    %8 = vector.broadcast %7 : vector<1x128xf32> to vector<24x128xf32>
    %9 = arith.addf %4, %8 : vector<24x128xf32>
    %cst_5 = arith.constant 2.000000e-01 : f32
    %10 = vector.broadcast %cst_5 : f32 to vector<24x128xf32>
    %11 = arith.mulf %10, %9 : vector<24x128xf32>
    %12 = arith.maximumf %9, %11 : vector<24x128xf32>
    %13 = arith.truncf %12 : vector<24x128xf32> to vector<24x128xbf16>
    %c0_6 = arith.constant 0 : index
    %c0_7 = arith.constant 0 : index
    %14 = vector.load %arg3[%c0_6, %c0_7] : memref<128x128xbf16, #tpu.memory_space<vmem>>, vector<128x128xbf16>
    %cst_8 = arith.constant dense<0.000000e+00> : vector<24x128xf32>
    %15 = tpu.matmul %13, %14, %cst_8 {dimension_numbers = #tpu.dot_dimension_numbers<[1], [0], [0], [1], [0, 0, 1, 1], [], []>} : vector<24x128xbf16>, vector<128x128xbf16>, vector<24x128xf32> -> vector<24x128xf32>
    %16 = vector.extract_strided_slice %0 {offsets = [1, 0], sizes = [1, 128], strides = [1, 1]} : vector<5x128xf32> to vector<1x128xf32>
    %17 = vector.shape_cast %16 : vector<1x128xf32> to vector<128xf32>
    %18 = vector.shape_cast %17 : vector<128xf32> to vector<1x128xf32>
    %19 = vector.broadcast %18 : vector<1x128xf32> to vector<24x128xf32>
    %20 = arith.addf %15, %19 : vector<24x128xf32>
    %cst_9 = arith.constant 2.000000e-01 : f32
    %21 = vector.broadcast %cst_9 : f32 to vector<24x128xf32>
    %22 = arith.mulf %21, %20 : vector<24x128xf32>
    %23 = arith.maximumf %20, %22 : vector<24x128xf32>
    %24 = arith.truncf %23 : vector<24x128xf32> to vector<24x128xbf16>
    %c0_10 = arith.constant 0 : index
    %c0_11 = arith.constant 0 : index
    %25 = vector.load %arg4[%c0_10, %c0_11] : memref<128x128xbf16, #tpu.memory_space<vmem>>, vector<128x128xbf16>
    %cst_12 = arith.constant dense<0.000000e+00> : vector<24x128xf32>
    %26 = tpu.matmul %24, %25, %cst_12 {dimension_numbers = #tpu.dot_dimension_numbers<[1], [0], [0], [1], [0, 0, 1, 1], [], []>} : vector<24x128xbf16>, vector<128x128xbf16>, vector<24x128xf32> -> vector<24x128xf32>
    %27 = vector.extract_strided_slice %0 {offsets = [2, 0], sizes = [1, 128], strides = [1, 1]} : vector<5x128xf32> to vector<1x128xf32>
    %28 = vector.shape_cast %27 : vector<1x128xf32> to vector<128xf32>
    %29 = vector.shape_cast %28 : vector<128xf32> to vector<1x128xf32>
    %30 = vector.broadcast %29 : vector<1x128xf32> to vector<24x128xf32>
    %31 = arith.addf %26, %30 : vector<24x128xf32>
    %cst_13 = arith.constant 2.000000e-01 : f32
    %32 = vector.broadcast %cst_13 : f32 to vector<24x128xf32>
    %33 = arith.mulf %32, %31 : vector<24x128xf32>
    %34 = arith.maximumf %31, %33 : vector<24x128xf32>
    %35 = arith.addf %12, %34 : vector<24x128xf32>
    %36 = arith.truncf %35 : vector<24x128xf32> to vector<24x128xbf16>
    %c0_14 = arith.constant 0 : index
    %c0_15 = arith.constant 0 : index
    %37 = vector.load %arg5[%c0_14, %c0_15] : memref<128x128xbf16, #tpu.memory_space<vmem>>, vector<128x128xbf16>
    %cst_16 = arith.constant dense<0.000000e+00> : vector<24x128xf32>
    %38 = tpu.matmul %36, %37, %cst_16 {dimension_numbers = #tpu.dot_dimension_numbers<[1], [0], [0], [1], [0, 0, 1, 1], [], []>} : vector<24x128xbf16>, vector<128x128xbf16>, vector<24x128xf32> -> vector<24x128xf32>
    %39 = vector.extract_strided_slice %0 {offsets = [3, 0], sizes = [1, 128], strides = [1, 1]} : vector<5x128xf32> to vector<1x128xf32>
    %40 = vector.shape_cast %39 : vector<1x128xf32> to vector<128xf32>
    %41 = vector.shape_cast %40 : vector<128xf32> to vector<1x128xf32>
    %42 = vector.broadcast %41 : vector<1x128xf32> to vector<24x128xf32>
    %43 = arith.addf %38, %42 : vector<24x128xf32>
    %cst_17 = arith.constant 2.000000e-01 : f32
    %44 = vector.broadcast %cst_17 : f32 to vector<24x128xf32>
    %45 = arith.mulf %44, %43 : vector<24x128xf32>
    %46 = arith.maximumf %43, %45 : vector<24x128xf32>
    %47 = arith.truncf %46 : vector<24x128xf32> to vector<24x128xbf16>
    %c0_18 = arith.constant 0 : index
    %c0_19 = arith.constant 0 : index
    %48 = vector.load %arg6[%c0_18, %c0_19] : memref<128x128xbf16, #tpu.memory_space<vmem>>, vector<128x128xbf16>
    %cst_20 = arith.constant dense<0.000000e+00> : vector<24x128xf32>
    %49 = tpu.matmul %47, %48, %cst_20 {dimension_numbers = #tpu.dot_dimension_numbers<[1], [0], [0], [1], [0, 0, 1, 1], [], []>} : vector<24x128xbf16>, vector<128x128xbf16>, vector<24x128xf32> -> vector<24x128xf32>
    %50 = vector.extract_strided_slice %0 {offsets = [4, 0], sizes = [1, 128], strides = [1, 1]} : vector<5x128xf32> to vector<1x128xf32>
    %51 = vector.shape_cast %50 : vector<1x128xf32> to vector<128xf32>
    %52 = vector.shape_cast %51 : vector<128xf32> to vector<1x128xf32>
    %53 = vector.broadcast %52 : vector<1x128xf32> to vector<24x128xf32>
    %54 = arith.addf %49, %53 : vector<24x128xf32>
    %cst_21 = arith.constant 2.000000e-01 : f32
    %55 = vector.broadcast %cst_21 : f32 to vector<24x128xf32>
    %56 = arith.mulf %55, %54 : vector<24x128xf32>
    %57 = arith.maximumf %54, %56 : vector<24x128xf32>
    %58 = arith.addf %35, %57 : vector<24x128xf32>
    %59 = arith.truncf %58 : vector<24x128xf32> to vector<24x128xbf16>
    %c0_22 = arith.constant 0 : index
    %c0_23 = arith.constant 0 : index
    %60 = vector.load %arg7[%c0_22, %c0_23] : memref<128x128xbf16, #tpu.memory_space<vmem>>, vector<128x128xbf16>
    %cst_24 = arith.constant dense<0.000000e+00> : vector<24x128xf32>
    %61 = tpu.matmul %59, %60, %cst_24 {dimension_numbers = #tpu.dot_dimension_numbers<[1], [0], [0], [1], [0, 0, 1, 1], [], []>} : vector<24x128xbf16>, vector<128x128xbf16>, vector<24x128xf32> -> vector<24x128xf32>
    %c0_25 = arith.constant 0 : index
    %c0_26 = arith.constant 0 : index
    %62 = vector.load %arg9[%c0_25, %c0_26] : memref<1x128xf32, #tpu.memory_space<vmem>>, vector<1x128xf32>
    %63 = vector.broadcast %62 : vector<1x128xf32> to vector<24x128xf32>
    %64 = arith.addf %61, %63 : vector<24x128xf32>
    %c0_27 = arith.constant 0 : index
    %c0_28 = arith.constant 0 : index
    %65 = vector.load %arg10[%c0_27, %c0_28] : memref<24x128xf32, #tpu.memory_space<vmem>>, vector<24x128xf32>
    tpu.vector_store %arg10[%c0_27, %c0_28], %64 {strides = array<i32>} : memref<24x128xf32, #tpu.memory_space<vmem>>, vector<24x128xf32>,
    return
  }
  func.func @transform_0(%arg0: i32) -> (i32, i32) {
    %c0_i32 = arith.constant 0 : i32
    %c0_i32_0 = arith.constant 0 : i32
    return %arg0, %c0_i32 : i32, i32
  }
  func.func @transform_1(%arg0: i32) -> (i32, i32) {
    %c0_i32 = arith.constant 0 : i32
    %c0_i32_0 = arith.constant 0 : i32
    %c0_i32_1 = arith.constant 0 : i32
    return %c0_i32, %c0_i32_0 : i32, i32
  }
  func.func @transform_2(%arg0: i32) -> (i32, i32) {
    %c0_i32 = arith.constant 0 : i32
    %c0_i32_0 = arith.constant 0 : i32
    %c0_i32_1 = arith.constant 0 : i32
    return %c0_i32, %c0_i32_0 : i32, i32
  }
  func.func @transform_3(%arg0: i32) -> (i32, i32) {
    %c0_i32 = arith.constant 0 : i32
    %c0_i32_0 = arith.constant 0 : i32
    %c0_i32_1 = arith.constant 0 : i32
    return %c0_i32, %c0_i32_0 : i32, i32
  }
  func.func @transform_4(%arg0: i32) -> (i32, i32) {
    %c0_i32 = arith.constant 0 : i32
    %c0_i32_0 = arith.constant 0 : i32
    %c0_i32_1 = arith.constant 0 : i32
    return %c0_i32, %c0_i32_0 : i32, i32
  }
  func.func @transform_5(%arg0: i32) -> (i32, i32) {
    %c0_i32 = arith.constant 0 : i32
    %c0_i32_0 = arith.constant 0 : i32
    %c0_i32_1 = arith.constant 0 : i32
    return %c0_i32, %c0_i32_0 : i32, i32
  }
  func.func @transform_6(%arg0: i32) -> (i32, i32) {
    %c0_i32 = arith.constant 0 : i32
    %c0_i32_0 = arith.constant 0 : i32
    %c0_i32_1 = arith.constant 0 : i32
    return %c0_i32, %c0_i32_0 : i32, i32
  }
  func.func @transform_7(%arg0: i32) -> (i32, i32) {
    %c0_i32 = arith.constant 0 : i32
    %c0_i32_0 = arith.constant 0 : i32
    %c0_i32_1 = arith.constant 0 : i32
    return %c0_i32, %c0_i32_0 : i32, i32
  }
  func.func @transform_8(%arg0: i32) -> (i32, i32) {
    %c0_i32 = arith.constant 0 : i32
    %c0_i32_0 = arith.constant 0 : i32
    %c0_i32_1 = arith.constant 0 : i32
    return %c0_i32, %c0_i32_0 : i32, i32
  }
  func.func @transform_9(%arg0: i32) -> (i32, i32) {
    %c0_i32 = arith.constant 0 : i32
    %c0_i32_0 = arith.constant 0 : i32
    return %arg0, %c0_i32 : i32, i32
  }
}

</mosaic_0001>

<llo_original>
// kernel: fc_block_forward.1
$region0: #{fc_block_forward.1}
  #allocation0 [shape = 'u32[]', space=smem, size = 0x4, offset = 0x4, fixed_abs, tag = 'smem constant byte address 0x4 - core index']
  #allocation1 [shape = 'u32[144,128]{1,0:T(1,128)}', space=vmem, size = 0x12000, scoped, tag = 'internal scratch']
  %s0 = inlined_call_operand.vmem [shape: f32[24,32], index: 0, kind: input, shape index: {}]
  %s1 = inlined_call_operand.hbm [shape: bf16[32,128], index: 1, kind: input, shape index: {}]
  %s2 = inlined_call_operand.hbm [shape: bf16[128,128], index: 2, kind: input, shape index: {}]
  %s3 = inlined_call_operand.hbm [shape: bf16[128,128], index: 3, kind: input, shape index: {}]
  %s4 = inlined_call_operand.vmem [shape: bf16[128,128], index: 4, kind: input, shape index: {}]
  %s5 = inlined_call_operand.hbm [shape: bf16[128,128], index: 5, kind: input, shape index: {}]
  %s6 = inlined_call_operand.hbm [shape: bf16[128,128], index: 6, kind: input, shape index: {}]
  %s7 = inlined_call_operand.vmem [shape: f32[5,128], index: 7, kind: input, shape index: {}]
  %s8 = inlined_call_operand.vmem [shape: f32[1,128], index: 8, kind: input, shape index: {}]
  %s9 = inlined_call_operand.hbm [shape: f32[24,128], index: 9, kind: output, shape index: {}]
  %s10 = sld [smem:[#allocation0]]
  $region66: #{fc_block_forward.1} parent=0
    _
  %s12 = ssub.s32 1, %s10
  %s13 = scalar_select 0, %s12, %s10
  $region1: #{fc_block_forward.1} parent=0
    #allocation2 [shape = 'u8[8192]{0}', space=vmem, size = 0x2000, scoped, tag = 'input window, operand 1, single buffered']
    #allocation3 [shape = 's32[1]{0}', space=sflag, size = 0x4, scoped, tag = 'scoped memory for fc_block_forward.1']
    #allocation4 [shape = 's32[1]{0}', space=sflag, size = 0x4, scoped, tag = 'scoped memory for fc_block_forward.1']
    #allocation5 [shape = 'u8[32768]{0}', space=vmem, size = 0x8000, scoped, tag = 'input window, operand 2, single buffered']
    #allocation6 [shape = 's32[1]{0}', space=sflag, size = 0x4, scoped, tag = 'scoped memory for fc_block_forward.1']
    #allocation7 [shape = 'u8[32768]{0}', space=vmem, size = 0x8000, scoped, tag = 'input window, operand 3, single buffered']
    #allocation8 [shape = 'u8[32768]{0}', space=vmem, size = 0x8000, scoped, tag = 'input window, operand 5, single buffered']
    #allocation9 [shape = 's32[1]{0}', space=sflag, size = 0x4, scoped, tag = 'scoped memory for fc_block_forward.1']
    #allocation10 [shape = 'u8[32768]{0}', space=vmem, size = 0x8000, scoped, tag = 'input window, operand 6, single buffered']
    #allocation11 [shape = 'u8[12288]{0}', space=vmem, size = 0x3000, scoped, tag = 'output window, operand 0, single buffered']
    %14 = vsyncpa [#allocation3], 0
    %15 = vsyncpa [#allocation6], 0
    %16 = vsyncpa [#allocation9], 0
    %17 = vsyncpa [#allocation4], 0
    // Predicated region
    $region2: #{fc_block_forward.1} parent=1 // pred_check
      _
    $region3: #{fc_block_forward.1} parent=1 // pred_check_branch
      %19 = sbr.rel (0) target = $region5
    $region4: #{fc_block_forward.1} parent=1 // pred_region
      _
    $region5: #{fc_block_forward.1} parent=1 // pred_fallthru
      _
    // Predicated region
    $region6: #{fc_block_forward.1} parent=1 // pred_check
      _
    $region7: #{fc_block_forward.1} parent=1 // pred_check_branch
      %21 = sbr.rel (0) target = $region9
    $region8: #{fc_block_forward.1} parent=1 // pred_region
      %s23 = ssub.s32 256, 256
      %24 = vsyncadd [#allocation3], %s23
      %s25 = sshll.u32 [#allocation2], 4
      %s26 = int_to_ptr.vmem [resolvable:$true] %s25
      %31 = dma.hbm_to_vmem [thread:$0]  %s1, 256, %s26, [#allocation3], 64, 64, 4
    $region9: #{fc_block_forward.1} parent=1 // pred_fallthru
      _
    // Predicated region
    $region10: #{fc_block_forward.1} parent=1 // pred_check
      _
    $region11: #{fc_block_forward.1} parent=1 // pred_check_branch
      %33 = sbr.rel (0) target = $region13
    $region12: #{fc_block_forward.1} parent=1 // pred_region
      %s35 = ssub.s32 1024, 1024
      %36 = vsyncadd [#allocation6], %s35
      %s37 = sshll.u32 [#allocation5], 4
      %s38 = int_to_ptr.vmem [resolvable:$true] %s37
      %43 = dma.hbm_to_vmem [thread:$0]  %s2, 1024, %s38, [#allocation6], 64, 64, 4
    $region13: #{fc_block_forward.1} parent=1 // pred_fallthru
      _
    // Predicated region
    $region14: #{fc_block_forward.1} parent=1 // pred_check
      _
    $region15: #{fc_block_forward.1} parent=1 // pred_check_branch
      %45 = sbr.rel (0) target = $region17
    $region16: #{fc_block_forward.1} parent=1 // pred_region
      %s47 = ssub.s32 1024, 1024
      %48 = vsyncadd [#allocation6], %s47
      %s49 = sshll.u32 [#allocation7], 4
      %s50 = int_to_ptr.vmem [resolvable:$true] %s49
      %55 = dma.hbm_to_vmem [thread:$0]  %s3, 1024, %s50, [#allocation6], 64, 64, 4
    $region17: #{fc_block_forward.1} parent=1 // pred_fallthru
      _
    // Predicated region
    $region18: #{fc_block_forward.1} parent=1 // pred_check
      _
    $region19: #{fc_block_forward.1} parent=1 // pred_check_branch
      %57 = sbr.rel (0) target = $region21
    $region20: #{fc_block_forward.1} parent=1 // pred_region
      _
    $region21: #{fc_block_forward.1} parent=1 // pred_fallthru
      _
    // Predicated region
    $region22: #{fc_block_forward.1} parent=1 // pred_check
      _
    $region23: #{fc_block_forward.1} parent=1 // pred_check_branch
      %59 = sbr.rel (0) target = $region25
    $region24: #{fc_block_forward.1} parent=1 // pred_region
      %s61 = ssub.s32 1024, 1024
      %62 = vsyncadd [#allocation9], %s61
      %s63 = sshll.u32 [#allocation8], 4
      %s64 = int_to_ptr.vmem [resolvable:$true] %s63
      %69 = dma.hbm_to_vmem [thread:$0]  %s5, 1024, %s64, [#allocation9], 64, 64, 4
    $region25: #{fc_block_forward.1} parent=1 // pred_fallthru
      _
    // Predicated region
    $region26: #{fc_block_forward.1} parent=1 // pred_check
      _
    $region27: #{fc_block_forward.1} parent=1 // pred_check_branch
      %71 = sbr.rel (0) target = $region29
    $region28: #{fc_block_forward.1} parent=1 // pred_region
      %s73 = ssub.s32 1024, 1024
      %74 = vsyncadd [#allocation9], %s73
      %s75 = sshll.u32 [#allocation10], 4
      %s76 = int_to_ptr.vmem [resolvable:$true] %s75
      %81 = dma.hbm_to_vmem [thread:$0]  %s6, 1024, %s76, [#allocation9], 64, 64, 4
    $region29: #{fc_block_forward.1} parent=1 // pred_fallthru
      _
    // Predicated region
    $region30: #{fc_block_forward.1} parent=1 // pred_check
      _
    $region31: #{fc_block_forward.1} parent=1 // pred_check_branch
      %83 = sbr.rel (0) target = $region33
    $region32: #{fc_block_forward.1} parent=1 // pred_region
      _
    $region33: #{fc_block_forward.1} parent=1 // pred_fallthru
      _
    // Predicated region
    $region34: #{fc_block_forward.1} parent=1 // pred_check
      _
    $region35: #{fc_block_forward.1} parent=1 // pred_check_branch
      %85 = sbr.rel (0) target = $region37
    $region36: #{fc_block_forward.1} parent=1 // pred_region
      _
    $region37: #{fc_block_forward.1} parent=1 // pred_fallthru
      _
    // Predicated region
    $region38: #{fc_block_forward.1} parent=1 // pred_check
      _
    $region39: #{fc_block_forward.1} parent=1 // pred_check_branch
      %87 = sbr.rel (0) target = $region41
    $region40: #{fc_block_forward.1} parent=1 // pred_region
      %88 = dma.done [#allocation3], 256
    $region41: #{fc_block_forward.1} parent=1 // pred_fallthru
      _
    // Predicated region
    $region42: #{fc_block_forward.1} parent=1 // pred_check
      _
    $region43: #{fc_block_forward.1} parent=1 // pred_check_branch
      %90 = sbr.rel (0) target = $region45
    $region44: #{fc_block_forward.1} parent=1 // pred_region
      %91 = dma.done [#allocation6], 1024
    $region45: #{fc_block_forward.1} parent=1 // pred_fallthru
      _
    // Predicated region
    $region46: #{fc_block_forward.1} parent=1 // pred_check
      _
    $region47: #{fc_block_forward.1} parent=1 // pred_check_branch
      %93 = sbr.rel (0) target = $region49
    $region48: #{fc_block_forward.1} parent=1 // pred_region
      %94 = dma.done [#allocation6], 1024
    $region49: #{fc_block_forward.1} parent=1 // pred_fallthru
      _
    // Predicated region
    $region50: #{fc_block_forward.1} parent=1 // pred_check
      _
    $region51: #{fc_block_forward.1} parent=1 // pred_check_branch
      %96 = sbr.rel (0) target = $region53
    $region52: #{fc_block_forward.1} parent=1 // pred_region
      %97 = dma.done [#allocation9], 1024
    $region53: #{fc_block_forward.1} parent=1 // pred_fallthru
      _
    // Predicated region
    $region54: #{fc_block_forward.1} parent=1 // pred_check
      _
    $region55: #{fc_block_forward.1} parent=1 // pred_check_branch
      %99 = sbr.rel (0) target = $region57
    $region56: #{fc_block_forward.1} parent=1 // pred_region
      %100 = dma.done [#allocation9], 1024
    $region57: #{fc_block_forward.1} parent=1 // pred_fallthru
      _
    %v102 = vld [vmem:[%s7] sm:$0x1f]
    %v103 = vld [vmem:[%s0] sm:$0xff]
    %v104 = vld [vmem:[%s0 + $0x8] sm:$0xff]
    %v105 = vld [vmem:[%s0 + $0x10] sm:$0xff]
    %v106 = vpack.c.bf16 %v104, %v103
    %v107 = vpack.c.bf16 %v105, %v105
    %v108 = vld [vmem:[#allocation2] sm:$0xf]
    %v109 = vld [vmem:[#allocation2 + $0x4] sm:$0xf]
    %v110 = vld [vmem:[#allocation2 + $0x8] sm:$0xf]
    %v111 = vld [vmem:[#allocation2 + $0xc] sm:$0xf]
    %v112 = vlaneseq
    %v113 = vshrl.u32 %v112, 7
    %v114 = vsub.s32 0, %v113
    %v115 = vrot.slane %v102, %v114
    %v120 = vunpack.c.l.b16 %v108
    %v121 = vunpack.c.l.b16 %v109
    %v122 = vunpack.c.l.b16 %v110
    %v123 = vunpack.c.l.b16 %v111
    %v124 = vpack.c.b16 %v121, %v120
    %v125 = vpack.c.b16 %v123, %v122
    %vm128 = vcmask 261120
    %v130 = vsel %vm128, %v106, 0
    %v133 = vsel %vm128, %v107, 0
    %135 = vmatprep.subr.bf16.mxu0 0
    %136 = vmatpush1.bf16.msra.mxu0 %v124
    %137 = vmatprep.subr.bf16.mxu0 0
    %138 = vmatpush1.bf16.msra.mxu0 %v125
    %139 = vmatprep.subr.bf16.mxu0 0
    %140 = vmatpush1.bf16.msra.mxu0 0
    %141 = vmatprep.subr.bf16.mxu0 0
    %142 = vmatpush1.bf16.msra.mxu0 0
    %143 = vmatprep.subr.bf16.mxu0 0
    %144 = vmatpush1.bf16.msra.mxu0 0
    %145 = vmatprep.subr.bf16.mxu0 0
    %146 = vmatpush1.bf16.msra.mxu0 0
    %147 = vmatprep.subr.bf16.mxu0 0
    %148 = vmatpush1.bf16.msra.mxu0 0
    %149 = vmatprep.subr.bf16.mxu0 0
    %150 = vmatpush1.bf16.msra.mxu0 0
    %151 = vmatprep.subr.bf16.mxu0 0
    %152 = vmatpush1.bf16.msra.mxu0 0
    %153 = vmatprep.subr.bf16.mxu0 0
    %154 = vmatpush1.bf16.msra.mxu0 0
    %155 = vmatprep.subr.bf16.mxu0 0
    %156 = vmatpush1.bf16.msra.mxu0 0
    %157 = vmatprep.subr.bf16.mxu0 0
    %158 = vmatpush1.bf16.msra.mxu0 0
    %159 = vmatprep.subr.bf16.mxu0 0
    %160 = vmatpush1.bf16.msra.mxu0 0
    %161 = vmatprep.subr.bf16.mxu0 0
    %162 = vmatpush1.bf16.msra.mxu0 0
    %163 = vmatprep.subr.bf16.mxu0 0
    %164 = vmatpush1.bf16.msra.mxu0 0
    %165 = vmatprep.subr.bf16.mxu0 0
    %166 = vmatpush1.bf16.msra.mxu0 0
    %167 = vmatprep.mubr.bf16.mxu0 0
    %168 = vmatmul.mubr.bf16.gmra.mrb[0].mxu0 %v130
    %v169 = vpop.f32.mrb[0].mxu0
    %v170 = vadd.f32 %v115, %v169
    %v171 = vpop.f32.mrb[0].mxu0
    %v172 = vpop.f32.mrb[0].mxu0
    %v173 = vadd.f32 %v115, %v172
    %v174 = vpop.f32.mrb[0].mxu0
    %175 = vmatprep.mubr.bf16.mxu0 0
    %176 = vmatmul.mubr.bf16.gmra.mrb[0].mxu0 %v133
    %v177 = vpop.f32.mrb[0].mxu0
    %v178 = vadd.f32 %v115, %v177
    %v179 = vpop.f32.mrb[0].mxu0
    %v180 = vpop.f32.mrb[0].mxu0
    %v181 = vpop.f32.mrb[0].mxu0
    %182 = vdwg.mxu0
    %v183 = vmul.f32 %v170, 0.2
    %v184 = vmul.f32 %v173, 0.2
    %v185 = vmul.f32 %v178, 0.2
    %v186 = vmax.f32 %v170, %v183
    %v187 = vmax.f32 %v173, %v184
    %v188 = vmax.f32 %v178, %v185
    %v189 = vpack.c.bf16 %v187, %v186
    %v190 = vpack.c.bf16 %v188, %v188
    %v191 = vld [vmem:[#allocation5] sm:$0xf]
    %v192 = vld [vmem:[#allocation5 + $0x4] sm:$0xf]
    %v193 = vld [vmem:[#allocation5 + $0x8] sm:$0xf]
    %v194 = vld [vmem:[#allocation5 + $0xc] sm:$0xf]
    %v195 = vld [vmem:[#allocation5 + $0x10] sm:$0xf]
    %v196 = vld [vmem:[#allocation5 + $0x14] sm:$0xf]
    %v197 = vld [vmem:[#allocation5 + $0x18] sm:$0xf]
    %v198 = vld [vmem:[#allocation5 + $0x1c] sm:$0xf]
    %v199 = vld [vmem:[#allocation5 + $0x20] sm:$0xf]
    %v200 = vld [vmem:[#allocation5 + $0x24] sm:$0xf]
    %v201 = vld [vmem:[#allocation5 + $0x28] sm:$0xf]
    %v202 = vld [vmem:[#allocation5 + $0x2c] sm:$0xf]
    %v203 = vld [vmem:[#allocation5 + $0x30] sm:$0xf]
    %v204 = vld [vmem:[#allocation5 + $0x34] sm:$0xf]
    %v205 = vld [vmem:[#allocation5 + $0x38] sm:$0xf]
    %v206 = vld [vmem:[#allocation5 + $0x3c] sm:$0xf]
    %v207 = vlaneseq
    %v208 = vshrl.u32 %v207, 7
    %v209 = vsub.s32 1, %v208
    %v210 = vrot.slane %v102, %v209
    %v227 = vunpack.c.l.b16 %v191
    %v228 = vunpack.c.l.b16 %v192
    %v229 = vunpack.c.l.b16 %v193
    %v230 = vunpack.c.l.b16 %v194
    %v231 = vunpack.c.l.b16 %v195
    %v232 = vunpack.c.l.b16 %v196
    %v233 = vunpack.c.l.b16 %v197
    %v234 = vunpack.c.l.b16 %v198
    %v235 = vunpack.c.l.b16 %v199
    %v236 = vunpack.c.l.b16 %v200
    %v237 = vunpack.c.l.b16 %v201
    %v238 = vunpack.c.l.b16 %v202
    %v239 = vunpack.c.l.b16 %v203
    %v240 = vunpack.c.l.b16 %v204
    %v241 = vunpack.c.l.b16 %v205
    %v242 = vunpack.c.l.b16 %v206
    %v243 = vpack.c.b16 %v228, %v227
    %v244 = vpack.c.b16 %v230, %v229
    %v245 = vpack.c.b16 %v232, %v231
    %v246 = vpack.c.b16 %v234, %v233
    %v247 = vpack.c.b16 %v236, %v235
    %v248 = vpack.c.b16 %v238, %v237
    %v249 = vpack.c.b16 %v240, %v239
    %v250 = vpack.c.b16 %v242, %v241
    %259 = vmatprep.subr.bf16.mxu0 0
    %260 = vmatpush1.bf16.msra.mxu0 %v243
    %261 = vmatprep.subr.bf16.mxu0 0
    %262 = vmatpush1.bf16.msra.mxu0 %v244
    %263 = vmatprep.subr.bf16.mxu0 0
    %264 = vmatpush1.bf16.msra.mxu0 %v245
    %265 = vmatprep.subr.bf16.mxu0 0
    %266 = vmatpush1.bf16.msra.mxu0 %v246
    %267 = vmatprep.subr.bf16.mxu0 0
    %268 = vmatpush1.bf16.msra.mxu0 %v247
    %269 = vmatprep.subr.bf16.mxu0 0
    %270 = vmatpush1.bf16.msra.mxu0 %v248
    %271 = vmatprep.subr.bf16.mxu0 0
    %272 = vmatpush1.bf16.msra.mxu0 %v249
    %273 = vmatprep.subr.bf16.mxu0 0
    %274 = vmatpush1.bf16.msra.mxu0 %v250
    %275 = vmatprep.subr.bf16.mxu0 0
    %276 = vmatpush1.bf16.msra.mxu0 0
    %277 = vmatprep.subr.bf16.mxu0 0
    %278 = vmatpush1.bf16.msra.mxu0 0
    %279 = vmatprep.subr.bf16.mxu0 0
    %280 = vmatpush1.bf16.msra.mxu0 0
    %281 = vmatprep.subr.bf16.mxu0 0
    %282 = vmatpush1.bf16.msra.mxu0 0
    %283 = vmatprep.subr.bf16.mxu0 0
    %284 = vmatpush1.bf16.msra.mxu0 0
    %285 = vmatprep.subr.bf16.mxu0 0
    %286 = vmatpush1.bf16.msra.mxu0 0
    %287 = vmatprep.subr.bf16.mxu0 0
    %288 = vmatpush1.bf16.msra.mxu0 0
    %289 = vmatprep.subr.bf16.mxu0 0
    %290 = vmatpush1.bf16.msra.mxu0 0
    %291 = vmatprep.mubr.bf16.mxu0 0
    %292 = vmatmul.mubr.bf16.gmra.mrb[0].mxu0 %v189
    %v293 = vpop.f32.mrb[0].mxu0
    %v294 = vadd.f32 %v210, %v293
    %v295 = vpop.f32.mrb[0].mxu0
    %v296 = vpop.f32.mrb[0].mxu0
    %v297 = vadd.f32 %v210, %v296
    %v298 = vpop.f32.mrb[0].mxu0
    %299 = vmatprep.mubr.bf16.mxu0 0
    %300 = vmatmul.mubr.bf16.gmra.mrb[0].mxu0 %v190
    %v301 = vpop.f32.mrb[0].mxu0
    %v302 = vadd.f32 %v210, %v301
    %v303 = vpop.f32.mrb[0].mxu0
    %v304 = vpop.f32.mrb[0].mxu0
    %v305 = vpop.f32.mrb[0].mxu0
    %306 = vdwg.mxu0
    %v307 = vmul.f32 %v294, 0.2
    %v308 = vmul.f32 %v297, 0.2
    %v309 = vmul.f32 %v302, 0.2
    %v310 = vmax.f32 %v294, %v307
    %v311 = vmax.f32 %v297, %v308
    %v312 = vmax.f32 %v302, %v309
    %v313 = vpack.c.bf16 %v311, %v310
    %v314 = vpack.c.bf16 %v312, %v312
    %v315 = vld [vmem:[#allocation7] sm:$0xf]
    %v316 = vld [vmem:[#allocation7 + $0x4] sm:$0xf]
    %v317 = vld [vmem:[#allocation7 + $0x8] sm:$0xf]
    %v318 = vld [vmem:[#allocation7 + $0xc] sm:$0xf]
    %v319 = vld [vmem:[#allocation7 + $0x10] sm:$0xf]
    %v320 = vld [vmem:[#allocation7 + $0x14] sm:$0xf]
    %v321 = vld [vmem:[#allocation7 + $0x18] sm:$0xf]
    %v322 = vld [vmem:[#allocation7 + $0x1c] sm:$0xf]
    %v323 = vld [vmem:[#allocation7 + $0x20] sm:$0xf]
    %v324 = vld [vmem:[#allocation7 + $0x24] sm:$0xf]
    %v325 = vld [vmem:[#allocation7 + $0x28] sm:$0xf]
    %v326 = vld [vmem:[#allocation7 + $0x2c] sm:$0xf]
    %v327 = vld [vmem:[#allocation7 + $0x30] sm:$0xf]
    %v328 = vld [vmem:[#allocation7 + $0x34] sm:$0xf]
    %v329 = vld [vmem:[#allocation7 + $0x38] sm:$0xf]
    %v330 = vld [vmem:[#allocation7 + $0x3c] sm:$0xf]
    %v331 = vlaneseq
    %v332 = vshrl.u32 %v331, 7
    %v333 = vsub.s32 2, %v332
    %v334 = vrot.slane %v102, %v333
    %v351 = vunpack.c.l.b16 %v315
    %v352 = vunpack.c.l.b16 %v316
    %v353 = vunpack.c.l.b16 %v317
    %v354 = vunpack.c.l.b16 %v318
    %v355 = vunpack.c.l.b16 %v319
    %v356 = vunpack.c.l.b16 %v320
    %v357 = vunpack.c.l.b16 %v321
    %v358 = vunpack.c.l.b16 %v322
    %v359 = vunpack.c.l.b16 %v323
    %v360 = vunpack.c.l.b16 %v324
    %v361 = vunpack.c.l.b16 %v325
    %v362 = vunpack.c.l.b16 %v326
    %v363 = vunpack.c.l.b16 %v327
    %v364 = vunpack.c.l.b16 %v328
    %v365 = vunpack.c.l.b16 %v329
    %v366 = vunpack.c.l.b16 %v330
    %v367 = vpack.c.b16 %v352, %v351
    %v368 = vpack.c.b16 %v354, %v353
    %v369 = vpack.c.b16 %v356, %v355
    %v370 = vpack.c.b16 %v358, %v357
    %v371 = vpack.c.b16 %v360, %v359
    %v372 = vpack.c.b16 %v362, %v361
    %v373 = vpack.c.b16 %v364, %v363
    %v374 = vpack.c.b16 %v366, %v365
    %383 = vmatprep.subr.bf16.mxu0 0
    %384 = vmatpush1.bf16.msra.mxu0 %v367
    %385 = vmatprep.subr.bf16.mxu0 0
    %386 = vmatpush1.bf16.msra.mxu0 %v368
    %387 = vmatprep.subr.bf16.mxu0 0
    %388 = vmatpush1.bf16.msra.mxu0 %v369
    %389 = vmatprep.subr.bf16.mxu0 0
    %390 = vmatpush1.bf16.msra.mxu0 %v370
    %391 = vmatprep.subr.bf16.mxu0 0
    %392 = vmatpush1.bf16.msra.mxu0 %v371
    %393 = vmatprep.subr.bf16.mxu0 0
    %394 = vmatpush1.bf16.msra.mxu0 %v372
    %395 = vmatprep.subr.bf16.mxu0 0
    %396 = vmatpush1.bf16.msra.mxu0 %v373
    %397 = vmatprep.subr.bf16.mxu0 0
    %398 = vmatpush1.bf16.msra.mxu0 %v374
    %399 = vmatprep.subr.bf16.mxu0 0
    %400 = vmatpush1.bf16.msra.mxu0 0
    %401 = vmatprep.subr.bf16.mxu0 0
    %402 = vmatpush1.bf16.msra.mxu0 0
    %403 = vmatprep.subr.bf16.mxu0 0
    %404 = vmatpush1.bf16.msra.mxu0 0
    %405 = vmatprep.subr.bf16.mxu0 0
    %406 = vmatpush1.bf16.msra.mxu0 0
    %407 = vmatprep.subr.bf16.mxu0 0
    %408 = vmatpush1.bf16.msra.mxu0 0
    %409 = vmatprep.subr.bf16.mxu0 0
    %410 = vmatpush1.bf16.msra.mxu0 0
    %411 = vmatprep.subr.bf16.mxu0 0
    %412 = vmatpush1.bf16.msra.mxu0 0
    %413 = vmatprep.subr.bf16.mxu0 0
    %414 = vmatpush1.bf16.msra.mxu0 0
    %415 = vmatprep.mubr.bf16.mxu0 0
    %416 = vmatmul.mubr.bf16.gmra.mrb[0].mxu0 %v313
    %v417 = vpop.f32.mrb[0].mxu0
    %v418 = vadd.f32 %v334, %v417
    %v419 = vpop.f32.mrb[0].mxu0
    %v420 = vpop.f32.mrb[0].mxu0
    %v421 = vadd.f32 %v334, %v420
    %v422 = vpop.f32.mrb[0].mxu0
    %423 = vmatprep.mubr.bf16.mxu0 0
    %424 = vmatmul.mubr.bf16.gmra.mrb[0].mxu0 %v314
    %v425 = vpop.f32.mrb[0].mxu0
    %v426 = vadd.f32 %v334, %v425
    %v427 = vpop.f32.mrb[0].mxu0
    %v428 = vpop.f32.mrb[0].mxu0
    %v429 = vpop.f32.mrb[0].mxu0
    %430 = vdwg.mxu0
    %v431 = vmul.f32 %v418, 0.2
    %v432 = vmul.f32 %v421, 0.2
    %v433 = vmul.f32 %v426, 0.2
    %v434 = vmax.f32 %v418, %v431
    %v435 = vmax.f32 %v421, %v432
    %v436 = vmax.f32 %v426, %v433
    %v437 = vadd.f32 %v186, %v434
    %v438 = vadd.f32 %v187, %v435
    %v439 = vadd.f32 %v188, %v436
    %v440 = vpack.c.bf16 %v438, %v437
    %v441 = vpack.c.bf16 %v439, %v439
    %v442 = vld [vmem:[%s4] sm:$0xf]
    %v443 = vld [vmem:[%s4 + $0x4] sm:$0xf]
    %v444 = vld [vmem:[%s4 + $0x8] sm:$0xf]
    %v445 = vld [vmem:[%s4 + $0xc] sm:$0xf]
    %v446 = vld [vmem:[%s4 + $0x10] sm:$0xf]
    %v447 = vld [vmem:[%s4 + $0x14] sm:$0xf]
    %v448 = vld [vmem:[%s4 + $0x18] sm:$0xf]
    %v449 = vld [vmem:[%s4 + $0x1c] sm:$0xf]
    %v450 = vld [vmem:[%s4 + $0x20] sm:$0xf]
    %v451 = vld [vmem:[%s4 + $0x24] sm:$0xf]
    %v452 = vld [vmem:[%s4 + $0x28] sm:$0xf]
    %v453 = vld [vmem:[%s4 + $0x2c] sm:$0xf]
    %v454 = vld [vmem:[%s4 + $0x30] sm:$0xf]
    %v455 = vld [vmem:[%s4 + $0x34] sm:$0xf]
    %v456 = vld [vmem:[%s4 + $0x38] sm:$0xf]
    %v457 = vld [vmem:[%s4 + $0x3c] sm:$0xf]
    %v458 = vlaneseq
    %v459 = vshrl.u32 %v458, 7
    %v460 = vsub.s32 3, %v459
    %v461 = vrot.slane %v102, %v460
    %v478 = vunpack.c.l.b16 %v442
    %v479 = vunpack.c.l.b16 %v443
    %v480 = vunpack.c.l.b16 %v444
    %v481 = vunpack.c.l.b16 %v445
    %v482 = vunpack.c.l.b16 %v446
    %v483 = vunpack.c.l.b16 %v447
    %v484 = vunpack.c.l.b16 %v448
    %v485 = vunpack.c.l.b16 %v449
    %v486 = vunpack.c.l.b16 %v450
    %v487 = vunpack.c.l.b16 %v451
    %v488 = vunpack.c.l.b16 %v452
    %v489 = vunpack.c.l.b16 %v453
    %v490 = vunpack.c.l.b16 %v454
    %v491 = vunpack.c.l.b16 %v455
    %v492 = vunpack.c.l.b16 %v456
    %v493 = vunpack.c.l.b16 %v457
    %v494 = vpack.c.b16 %v479, %v478
    %v495 = vpack.c.b16 %v481, %v480
    %v496 = vpack.c.b16 %v483, %v482
    %v497 = vpack.c.b16 %v485, %v484
    %v498 = vpack.c.b16 %v487, %v486
    %v499 = vpack.c.b16 %v489, %v488
    %v500 = vpack.c.b16 %v491, %v490
    %v501 = vpack.c.b16 %v493, %v492
    %510 = vmatprep.subr.bf16.mxu0 0
    %511 = vmatpush1.bf16.msra.mxu0 %v494
    %512 = vmatprep.subr.bf16.mxu0 0
    %513 = vmatpush1.bf16.msra.mxu0 %v495
    %514 = vmatprep.subr.bf16.mxu0 0
    %515 = vmatpush1.bf16.msra.mxu0 %v496
    %516 = vmatprep.subr.bf16.mxu0 0
    %517 = vmatpush1.bf16.msra.mxu0 %v497
    %518 = vmatprep.subr.bf16.mxu0 0
    %519 = vmatpush1.bf16.msra.mxu0 %v498
    %520 = vmatprep.subr.bf16.mxu0 0
    %521 = vmatpush1.bf16.msra.mxu0 %v499
    %522 = vmatprep.subr.bf16.mxu0 0
    %523 = vmatpush1.bf16.msra.mxu0 %v500
    %524 = vmatprep.subr.bf16.mxu0 0
    %525 = vmatpush1.bf16.msra.mxu0 %v501
    %526 = vmatprep.subr.bf16.mxu0 0
    %527 = vmatpush1.bf16.msra.mxu0 0
    %528 = vmatprep.subr.bf16.mxu0 0
    %529 = vmatpush1.bf16.msra.mxu0 0
    %530 = vmatprep.subr.bf16.mxu0 0
    %531 = vmatpush1.bf16.msra.mxu0 0
    %532 = vmatprep.subr.bf16.mxu0 0
    %533 = vmatpush1.bf16.msra.mxu0 0
    %534 = vmatprep.subr.bf16.mxu0 0
    %535 = vmatpush1.bf16.msra.mxu0 0
    %536 = vmatprep.subr.bf16.mxu0 0
    %537 = vmatpush1.bf16.msra.mxu0 0
    %538 = vmatprep.subr.bf16.mxu0 0
    %539 = vmatpush1.bf16.msra.mxu0 0
    %540 = vmatprep.subr.bf16.mxu0 0
    %541 = vmatpush1.bf16.msra.mxu0 0
    %542 = vmatprep.mubr.bf16.mxu0 0
    %543 = vmatmul.mubr.bf16.gmra.mrb[0].mxu0 %v440
    %v544 = vpop.f32.mrb[0].mxu0
    %v545 = vadd.f32 %v461, %v544
    %v546 = vpop.f32.mrb[0].mxu0
    %v547 = vpop.f32.mrb[0].mxu0
    %v548 = vadd.f32 %v461, %v547
    %v549 = vpop.f32.mrb[0].mxu0
    %550 = vmatprep.mubr.bf16.mxu0 0
    %551 = vmatmul.mubr.bf16.gmra.mrb[0].mxu0 %v441
    %v552 = vpop.f32.mrb[0].mxu0
    %v553 = vadd.f32 %v461, %v552
    %v554 = vpop.f32.mrb[0].mxu0
    %v555 = vpop.f32.mrb[0].mxu0
    %v556 = vpop.f32.mrb[0].mxu0
    %557 = vdwg.mxu0
    %v558 = vmul.f32 %v545, 0.2
    %v559 = vmul.f32 %v548, 0.2
    %v560 = vmul.f32 %v553, 0.2
    %v561 = vmax.f32 %v545, %v558
    %v562 = vmax.f32 %v548, %v559
    %v563 = vmax.f32 %v553, %v560
    %v564 = vpack.c.bf16 %v562, %v561
    %v565 = vpack.c.bf16 %v563, %v563
    %v566 = vld [vmem:[#allocation8] sm:$0xf]
    %v567 = vld [vmem:[#allocation8 + $0x4] sm:$0xf]
    %v568 = vld [vmem:[#allocation8 + $0x8] sm:$0xf]
    %v569 = vld [vmem:[#allocation8 + $0xc] sm:$0xf]
    %v570 = vld [vmem:[#allocation8 + $0x10] sm:$0xf]
    %v571 = vld [vmem:[#allocation8 + $0x14] sm:$0xf]
    %v572 = vld [vmem:[#allocation8 + $0x18] sm:$0xf]
    %v573 = vld [vmem:[#allocation8 + $0x1c] sm:$0xf]
    %v574 = vld [vmem:[#allocation8 + $0x20] sm:$0xf]
    %v575 = vld [vmem:[#allocation8 + $0x24] sm:$0xf]
    %v576 = vld [vmem:[#allocation8 + $0x28] sm:$0xf]
    %v577 = vld [vmem:[#allocation8 + $0x2c] sm:$0xf]
    %v578 = vld [vmem:[#allocation8 + $0x30] sm:$0xf]
    %v579 = vld [vmem:[#allocation8 + $0x34] sm:$0xf]
    %v580 = vld [vmem:[#allocation8 + $0x38] sm:$0xf]
    %v581 = vld [vmem:[#allocation8 + $0x3c] sm:$0xf]
    %v582 = vlaneseq
    %v583 = vshrl.u32 %v582, 7
    %v584 = vsub.s32 4, %v583
    %v585 = vrot.slane %v102, %v584
    %v602 = vunpack.c.l.b16 %v566
    %v603 = vunpack.c.l.b16 %v567
    %v604 = vunpack.c.l.b16 %v568
    %v605 = vunpack.c.l.b16 %v569
    %v606 = vunpack.c.l.b16 %v570
    %v607 = vunpack.c.l.b16 %v571
    %v608 = vunpack.c.l.b16 %v572
    %v609 = vunpack.c.l.b16 %v573
    %v610 = vunpack.c.l.b16 %v574
    %v611 = vunpack.c.l.b16 %v575
    %v612 = vunpack.c.l.b16 %v576
    %v613 = vunpack.c.l.b16 %v577
    %v614 = vunpack.c.l.b16 %v578
    %v615 = vunpack.c.l.b16 %v579
    %v616 = vunpack.c.l.b16 %v580
    %v617 = vunpack.c.l.b16 %v581
    %v618 = vpack.c.b16 %v603, %v602
    %v619 = vpack.c.b16 %v605, %v604
    %v620 = vpack.c.b16 %v607, %v606
    %v621 = vpack.c.b16 %v609, %v608
    %v622 = vpack.c.b16 %v611, %v610
    %v623 = vpack.c.b16 %v613, %v612
    %v624 = vpack.c.b16 %v615, %v614
    %v625 = vpack.c.b16 %v617, %v616
    %634 = vmatprep.subr.bf16.mxu0 0
    %635 = vmatpush1.bf16.msra.mxu0 %v618
    %636 = vmatprep.subr.bf16.mxu0 0
    %637 = vmatpush1.bf16.msra.mxu0 %v619
    %638 = vmatprep.subr.bf16.mxu0 0
    %639 = vmatpush1.bf16.msra.mxu0 %v620
    %640 = vmatprep.subr.bf16.mxu0 0
    %641 = vmatpush1.bf16.msra.mxu0 %v621
    %642 = vmatprep.subr.bf16.mxu0 0
    %643 = vmatpush1.bf16.msra.mxu0 %v622
    %644 = vmatprep.subr.bf16.mxu0 0
    %645 = vmatpush1.bf16.msra.mxu0 %v623
    %646 = vmatprep.subr.bf16.mxu0 0
    %647 = vmatpush1.bf16.msra.mxu0 %v624
    %648 = vmatprep.subr.bf16.mxu0 0
    %649 = vmatpush1.bf16.msra.mxu0 %v625
    %650 = vmatprep.subr.bf16.mxu0 0
    %651 = vmatpush1.bf16.msra.mxu0 0
    %652 = vmatprep.subr.bf16.mxu0 0
    %653 = vmatpush1.bf16.msra.mxu0 0
    %654 = vmatprep.subr.bf16.mxu0 0
    %655 = vmatpush1.bf16.msra.mxu0 0
    %656 = vmatprep.subr.bf16.mxu0 0
    %657 = vmatpush1.bf16.msra.mxu0 0
    %658 = vmatprep.subr.bf16.mxu0 0
    %659 = vmatpush1.bf16.msra.mxu0 0
    %660 = vmatprep.subr.bf16.mxu0 0
    %661 = vmatpush1.bf16.msra.mxu0 0
    %662 = vmatprep.subr.bf16.mxu0 0
    %663 = vmatpush1.bf16.msra.mxu0 0
    %664 = vmatprep.subr.bf16.mxu0 0
    %665 = vmatpush1.bf16.msra.mxu0 0
    %666 = vmatprep.mubr.bf16.mxu0 0
    %667 = vmatmul.mubr.bf16.gmra.mrb[0].mxu0 %v564
    %v668 = vpop.f32.mrb[0].mxu0
    %v669 = vadd.f32 %v585, %v668
    %v670 = vpop.f32.mrb[0].mxu0
    %v671 = vpop.f32.mrb[0].mxu0
    %v672 = vadd.f32 %v585, %v671
    %v673 = vpop.f32.mrb[0].mxu0
    %674 = vmatprep.mubr.bf16.mxu0 0
    %675 = vmatmul.mubr.bf16.gmra.mrb[0].mxu0 %v565
    %v676 = vpop.f32.mrb[0].mxu0
    %v677 = vadd.f32 %v585, %v676
    %v678 = vpop.f32.mrb[0].mxu0
    %v679 = vpop.f32.mrb[0].mxu0
    %v680 = vpop.f32.mrb[0].mxu0
    %681 = vdwg.mxu0
    %v682 = vmul.f32 %v669, 0.2
    %v683 = vmul.f32 %v672, 0.2
    %v684 = vmul.f32 %v677, 0.2
    %v685 = vmax.f32 %v669, %v682
    %v686 = vmax.f32 %v672, %v683
    %v687 = vmax.f32 %v677, %v684
    %v688 = vadd.f32 %v437, %v685
    %v689 = vadd.f32 %v438, %v686
    %v690 = vadd.f32 %v439, %v687
    %v691 = vpack.c.bf16 %v689, %v688
    %v692 = vpack.c.bf16 %v690, %v690
    %v693 = vld [vmem:[#allocation10] sm:$0xf]
    %v694 = vld [vmem:[#allocation10 + $0x4] sm:$0xf]
    %v695 = vld [vmem:[#allocation10 + $0x8] sm:$0xf]
    %v696 = vld [vmem:[#allocation10 + $0xc] sm:$0xf]
    %v697 = vld [vmem:[#allocation10 + $0x10] sm:$0xf]
    %v698 = vld [vmem:[#allocation10 + $0x14] sm:$0xf]
    %v699 = vld [vmem:[#allocation10 + $0x18] sm:$0xf]
    %v700 = vld [vmem:[#allocation10 + $0x1c] sm:$0xf]
    %v701 = vld [vmem:[#allocation10 + $0x20] sm:$0xf]
    %v702 = vld [vmem:[#allocation10 + $0x24] sm:$0xf]
    %v703 = vld [vmem:[#allocation10 + $0x28] sm:$0xf]
    %v704 = vld [vmem:[#allocation10 + $0x2c] sm:$0xf]
    %v705 = vld [vmem:[#allocation10 + $0x30] sm:$0xf]
    %v706 = vld [vmem:[#allocation10 + $0x34] sm:$0xf]
    %v707 = vld [vmem:[#allocation10 + $0x38] sm:$0xf]
    %v708 = vld [vmem:[#allocation10 + $0x3c] sm:$0xf]
    %v709 = vld [vmem:[%s8] sm:$0x1]
    %v711 = vlaneseq
    %v712 = vshrl.u32 %v711, 7
    %v713 = vsub.s32 0, %v712
    %v714 = vrot.slane %v709, %v713
    %v732 = vunpack.c.l.b16 %v693
    %v733 = vunpack.c.l.b16 %v694
    %v734 = vunpack.c.l.b16 %v695
    %v735 = vunpack.c.l.b16 %v696
    %v736 = vunpack.c.l.b16 %v697
    %v737 = vunpack.c.l.b16 %v698
    %v738 = vunpack.c.l.b16 %v699
    %v739 = vunpack.c.l.b16 %v700
    %v740 = vunpack.c.l.b16 %v701
    %v741 = vunpack.c.l.b16 %v702
    %v742 = vunpack.c.l.b16 %v703
    %v743 = vunpack.c.l.b16 %v704
    %v744 = vunpack.c.l.b16 %v705
    %v745 = vunpack.c.l.b16 %v706
    %v746 = vunpack.c.l.b16 %v707
    %v747 = vunpack.c.l.b16 %v708
    %v748 = vpack.c.b16 %v733, %v732
    %v749 = vpack.c.b16 %v735, %v734
    %v750 = vpack.c.b16 %v737, %v736
    %v751 = vpack.c.b16 %v739, %v738
    %v752 = vpack.c.b16 %v741, %v740
    %v753 = vpack.c.b16 %v743, %v742
    %v754 = vpack.c.b16 %v745, %v744
    %v755 = vpack.c.b16 %v747, %v746
    %764 = vmatprep.subr.bf16.mxu0 0
    %765 = vmatpush1.bf16.msra.mxu0 %v748
    %766 = vmatprep.subr.bf16.mxu0 0
    %767 = vmatpush1.bf16.msra.mxu0 %v749
    %768 = vmatprep.subr.bf16.mxu0 0
    %769 = vmatpush1.bf16.msra.mxu0 %v750
    %770 = vmatprep.subr.bf16.mxu0 0
    %771 = vmatpush1.bf16.msra.mxu0 %v751
    %772 = vmatprep.subr.bf16.mxu0 0
    %773 = vmatpush1.bf16.msra.mxu0 %v752
    %774 = vmatprep.subr.bf16.mxu0 0
    %775 = vmatpush1.bf16.msra.mxu0 %v753
    %776 = vmatprep.subr.bf16.mxu0 0
    %777 = vmatpush1.bf16.msra.mxu0 %v754
    %778 = vmatprep.subr.bf16.mxu0 0
    %779 = vmatpush1.bf16.msra.mxu0 %v755
    %780 = vmatprep.subr.bf16.mxu0 0
    %781 = vmatpush1.bf16.msra.mxu0 0
    %782 = vmatprep.subr.bf16.mxu0 0
    %783 = vmatpush1.bf16.msra.mxu0 0
    %784 = vmatprep.subr.bf16.mxu0 0
    %785 = vmatpush1.bf16.msra.mxu0 0
    %786 = vmatprep.subr.bf16.mxu0 0
    %787 = vmatpush1.bf16.msra.mxu0 0
    %788 = vmatprep.subr.bf16.mxu0 0
    %789 = vmatpush1.bf16.msra.mxu0 0
    %790 = vmatprep.subr.bf16.mxu0 0
    %791 = vmatpush1.bf16.msra.mxu0 0
    %792 = vmatprep.subr.bf16.mxu0 0
    %793 = vmatpush1.bf16.msra.mxu0 0
    %794 = vmatprep.subr.bf16.mxu0 0
    %795 = vmatpush1.bf16.msra.mxu0 0
    %796 = vmatprep.mubr.bf16.mxu0 0
    %797 = vmatmul.mubr.bf16.gmra.mrb[0].mxu0 %v691
    %v798 = vpop.f32.mrb[0].mxu0
    %v799 = vadd.f32 %v714, %v798
    %v800 = vpop.f32.mrb[0].mxu0
    %v801 = vpop.f32.mrb[0].mxu0
    %v802 = vadd.f32 %v714, %v801
    %v803 = vpop.f32.mrb[0].mxu0
    %804 = vmatprep.mubr.bf16.mxu0 0
    %805 = vmatmul.mubr.bf16.gmra.mrb[0].mxu0 %v692
    %v806 = vpop.f32.mrb[0].mxu0
    %v807 = vadd.f32 %v714, %v806
    %v808 = vpop.f32.mrb[0].mxu0
    %v809 = vpop.f32.mrb[0].mxu0
    %v810 = vpop.f32.mrb[0].mxu0
    %811 = vdwg.mxu0
    %812 = vst [vmem:[#allocation11] sm:$0xff] %v799
    %813 = vst [vmem:[#allocation11 + $0x8] sm:$0xff] %v802
    %814 = vst [vmem:[#allocation11 + $0x10] sm:$0xff] %v807
    // Predicated region
    $region58: #{fc_block_forward.1} parent=1 // pred_check
      _
    $region59: #{fc_block_forward.1} parent=1 // pred_check_branch
      %816 = sbr.rel (0) target = $region61
    $region60: #{fc_block_forward.1} parent=1 // pred_region
      %s818 = ssub.s32 384, 384
      %819 = vsyncadd [#allocation4], %s818
      %s820 = sshll.u32 [#allocation11], 4
      %s821 = int_to_ptr.vmem [resolvable:$true] %s820
      %826 = dma.vmem_to_hbm [thread:$0]  %s821, 384, %s9, [#allocation4], 128, 128, 8
    $region61: #{fc_block_forward.1} parent=1 // pred_fallthru
      _
    // Predicated region
    $region62: #{fc_block_forward.1} parent=1 // pred_check
      _
    $region63: #{fc_block_forward.1} parent=1 // pred_check_branch
      %828 = sbr.rel (0) target = $region65
    $region64: #{fc_block_forward.1} parent=1 // pred_region
      %829 = dma.done [#allocation4], 384
    $region65: #{fc_block_forward.1} parent=1 // pred_fallthru
      _
    %830 = vsyncpa [#allocation3], 1
    %831 = vsyncpa [#allocation6], 1
    %832 = vsyncpa [#allocation9], 1
    %833 = vsyncpa [#allocation4], 1

</llo_original>
